<compile_context>
chip_gen: v6e
topology: v6e:2x2x1
jax: 0.10.0
libtpu: 0.0.40
codegen_flags: <defaults>
</compile_context>

<pallas_src>
import jax
import jax.numpy as jnp
from jax.experimental import pallas as pl
from jax.experimental.pallas import tpu as pltpu


_VMEM_LIMIT_BYTES = 40 * 1024 * 1024          # safe on v5e/v6e (128 MiB) & v7x (64 MiB)
_WEIGHT_RESIDENT_CAP_BYTES = 8 * 1024 * 1024  # bf16 weight <= 8 MiB -> keep it resident


def _round_up(x, m):
    return ((x + m - 1) // m) * m


def _mlp_kernel_resident(x_ref, w_ref, b_ref, o_ref):
    # Whole weight resident in VMEM; one MXU matmul per batch tile.
    acc = jnp.dot(x_ref[...], w_ref[...], preferred_element_type=jnp.float32)
    # bias [1, N] broadcasts over rows (VPU); tanh goes to the EUP.
    o_ref[...] = jnp.tanh(acc + b_ref[...]).astype(o_ref.dtype)


def _mlp_kernel_tiled(x_ref, w_ref, b_ref, o_ref):
    # Grid = (batch tiles, out-feature tiles, reduction tiles); reduction last.
    k = pl.program_id(2)

    @pl.when(k == 0)
    def _init():
        o_ref[...] = jnp.zeros_like(o_ref)

    # bf16 MXU matmul, f32 accumulation directly into the (f32) output tile —
    # no separate VMEM scratch needed.
    o_ref[...] += jnp.dot(x_ref[...], w_ref[...], preferred_element_type=jnp.float32)

    @pl.when(k == pl.num_programs(2) - 1)
    def _finalize():
        o_ref[...] = jnp.tanh(o_ref[...] + b_ref[...]).astype(o_ref.dtype)


def mlp_layer(features, weight, bias, *, compute_dtype=jnp.bfloat16,
              tm=512, tn=512, tk=1024, weight_resident=None):
    """tanh(features @ weight + bias).

    features: [B, H_in] f32, weight: [H_in, H_out] f32 (== torch W.T),
    bias: [H_out] f32 -> [B, H_out] f32.
    """
    B, H_in = features.shape
    H_in_w, H_out = weight.shape
    assert H_in == H_in_w and bias.shape == (H_out,)
    out_dtype = features.dtype

    # bf16 feed to the MXU (f32 accumulation stays inside the kernel).
    x = features.astype(compute_dtype)
    w = weight.astype(compute_dtype)
    b = bias.astype(jnp.float32).reshape(1, H_out)

    itemsize = jnp.dtype(compute_dtype).itemsize
    w_bytes = H_in * H_out * itemsize
    if weight_resident is None:
        weight_resident = w_bytes <= _WEIGHT_RESIDENT_CAP_BYTES

    cost = pl.CostEstimate(
        flops=2 * B * H_in * H_out,
        transcendentals=B * H_out,
        bytes_accessed=(B * H_in + H_in * H_out) * itemsize + (B * H_out + H_out) * 4,
    )

    if weight_resident:
        # ---- Path A: weight resident in VMEM, grid only over batch tiles. ----
        # Full-dim blocks on the feature axes bypass the (8,128) constraint, so
        # no padding / extra HBM round trip for H_in / H_out.
        tm_a = min(tm, _round_up(B, 8))
        if B >= 16 and pl.cdiv(B, tm_a) < 2:
            # Give each v7x TensorCore at least one batch tile (no-op on v5e/v6e).
            tm_a = _round_up(pl.cdiv(B, 2), 8)
        Bp = _round_up(B, tm_a)
        xp = x if Bp == B else jnp.pad(x, ((0, Bp - B), (0, 0)))

        out = pl.pallas_call(
            _mlp_kernel_resident,
            out_shape=jax.ShapeDtypeStruct((Bp, H_out), out_dtype),
            grid_spec=pltpu.PrefetchScalarGridSpec(
                num_scalar_prefetch=0,
                grid=(Bp // tm_a,),
                in_specs=[
                    pl.BlockSpec((tm_a, H_in), lambda i: (i, 0)),   # activations
                    pl.BlockSpec((H_in, H_out), lambda i: (0, 0)),  # full weight, loaded once
                    pl.BlockSpec((1, H_out), lambda i: (0, 0)),     # bias
                ],
                out_specs=pl.BlockSpec((tm_a, H_out), lambda i: (i, 0)),
            ),
            compiler_params=pltpu.CompilerParams(
                dimension_semantics=("parallel",),
                vmem_limit_bytes=_VMEM_LIMIT_BYTES,
            ),
            cost_estimate=cost,
        )(xp, w, b)
        return out if Bp == B else out[:B]

    # ---- Path B: reduction-last 3-D tiled grid for large hidden sizes. ----
    Kp = _round_up(H_in, 128)
    Np = _round_up(H_out, 128)
    tk_b = min(tk, Kp)
    tn_b = min(tn, Np)
    tm_b = min(tm, _round_up(B, 8))
    Bp = _round_up(B, tm_b)

    # Zero padding: padded K rows/cols contribute 0, padded bias lanes are 0,
    # padded output lanes are tanh(0)=0 and are sliced away.  Pads are skipped
    # entirely when the dims are already aligned.
    xp = x if (Bp == B and Kp == H_in) else jnp.pad(x, ((0, Bp - B), (0, Kp - H_in)))
    wp = w if (Kp == H_in and Np == H_out) else jnp.pad(w, ((0, Kp - H_in), (0, Np - H_out)))
    bp = b if Np == H_out else jnp.pad(b, ((0, 0), (0, Np - H_out)))

    grid = (Bp // tm_b, Np // tn_b, Kp // tk_b)

    out = pl.pallas_call(
        _mlp_kernel_tiled,
        out_shape=jax.ShapeDtypeStruct((Bp, Np), jnp.float32),  # f32 accumulator output
        grid_spec=pltpu.PrefetchScalarGridSpec(
            num_scalar_prefetch=0,
            grid=grid,
            in_specs=[
                pl.BlockSpec((tm_b, tk_b), lambda i, j, k: (i, k)),  # activations
                pl.BlockSpec((tk_b, tn_b), lambda i, j, k: (k, j)),  # weight tile
                pl.BlockSpec((1, tn_b), lambda i, j, k: (0, j)),     # bias per N tile
            ],
            out_specs=pl.BlockSpec((tm_b, tn_b), lambda i, j, k: (i, j)),
        ),
        compiler_params=pltpu.CompilerParams(
            dimension_semantics=("parallel", "parallel", "arbitrary"),
            vmem_limit_bytes=_VMEM_LIMIT_BYTES,
        ),
        cost_estimate=cost,
    )(xp, wp, bp)
    return out[:B, :H_out].astype(out_dtype)


if __name__ == "__main__":
    # Shapes implied by the module: a batch of CLS vectors [B, hidden_size].
    B, H = 64, 32
    kx, kw, kb = jax.random.split(jax.random.PRNGKey(0), 3)
    x = jax.random.normal(kx, (B, H), dtype=jnp.float32)
    # deterministic parameter init (synthetic, not a checkpoint)
    w = jax.random.normal(kw, (H, H), dtype=jnp.float32) * (1.0 / jnp.sqrt(H))
    b = jax.random.normal(kb, (H,), dtype=jnp.float32) * 0.01

    out = mlp_layer(x, w, b)  # weight-resident path
    jax.block_until_ready(out)
    ref = jnp.tanh(x @ w + b)
    assert out.shape == (B, H)
    # bf16 MXU feed with f32 accumulation -> relaxed tolerance vs the f32 ref.
    assert jnp.allclose(out, ref, atol=3e-2, rtol=3e-2), float(jnp.max(jnp.abs(out - ref)))

    # Also exercise the tiled (reduction-last 3-D grid) path at a small,
    # 128-aligned hidden size.
    B2, H2 = 64, 256
    kx2, kw2, kb2 = jax.random.split(jax.random.PRNGKey(1), 3)
    x2 = jax.random.normal(kx2, (B2, H2), dtype=jnp.float32)
    w2 = jax.random.normal(kw2, (H2, H2), dtype=jnp.float32) * (1.0 / jnp.sqrt(H2))
    b2 = jax.random.normal(kb2, (H2,), dtype=jnp.float32) * 0.01
    out2 = mlp_layer(x2, w2, b2, weight_resident=False)
    jax.block_until_ready(out2)
    ref2 = jnp.tanh(x2 @ w2 + b2)
    assert out2.shape == (B2, H2)
    assert jnp.allclose(out2, ref2, atol=3e-2, rtol=3e-2), float(jnp.max(jnp.abs(out2 - ref2)))

    print("KERNEL_OK")
</pallas_src>

<mosaic_0001>
module attributes {stable_mosaic.version = 11 : i64} {
  func.func @_mlp_kernel_resident(%arg0: i32, %arg1: memref<32x32xbf16, #tpu.memory_space<vmem>>, %arg2: memref<32x32xbf16, #tpu.memory_space<vmem>>, %arg3: memref<1x32xf32, #tpu.memory_space<vmem>>, %arg4: memref<32x32xf32, #tpu.memory_space<vmem>>) attributes {dimension_semantics = [#tpu.dimension_semantics<parallel>], iteration_bounds = array<i64: 2>, scalar_prefetch = 0 : i64, scratch_operands = 0 : i64, tpu.core_type = #tpu.core_type<tc>, window_params = [{transform_indices = @transform_0, window_bounds = array<i64: 32, 32>}, {pipeline_mode = #tpu.pipeline_mode<synchronous>, transform_indices = @transform_1, window_bounds = array<i64: 32, 32>}, {pipeline_mode = #tpu.pipeline_mode<synchronous>, transform_indices = @transform_2, window_bounds = array<i64: 1, 32>}, {transform_indices = @transform_3, window_bounds = array<i64: 32, 32>}]} {
    %c0 = arith.constant 0 : index
    %c0_0 = arith.constant 0 : index
    %0 = vector.load %arg1[%c0, %c0_0] : memref<32x32xbf16, #tpu.memory_space<vmem>>, vector<32x32xbf16>
    %c0_1 = arith.constant 0 : index
    %c0_2 = arith.constant 0 : index
    %1 = vector.load %arg2[%c0_1, %c0_2] : memref<32x32xbf16, #tpu.memory_space<vmem>>, vector<32x32xbf16>
    %cst = arith.constant dense<0.000000e+00> : vector<32x32xf32>
    %2 = tpu.matmul %0, %1, %cst {dimension_numbers = #tpu.dot_dimension_numbers<[1], [0], [0], [1], [0, 0, 1, 1], [], []>} : vector<32x32xbf16>, vector<32x32xbf16>, vector<32x32xf32> -> vector<32x32xf32>
    %c0_3 = arith.constant 0 : index
    %c0_4 = arith.constant 0 : index
    %3 = vector.load %arg3[%c0_3, %c0_4] : memref<1x32xf32, #tpu.memory_space<vmem>>, vector<1x32xf32>
    %4 = vector.broadcast %3 : vector<1x32xf32> to vector<32x32xf32>
    %5 = arith.addf %2, %4 : vector<32x32xf32>
    %6 = math.tanh %5 : vector<32x32xf32>
    %c0_5 = arith.constant 0 : index
    %c0_6 = arith.constant 0 : index
    %7 = vector.load %arg4[%c0_5, %c0_6] : memref<32x32xf32, #tpu.memory_space<vmem>>, vector<32x32xf32>
    tpu.vector_store %arg4[%c0_5, %c0_6], %6 {strides = array<i32>} : memref<32x32xf32, #tpu.memory_space<vmem>>, vector<32x32xf32>,
    return
  }
  func.func @transform_0(%arg0: i32) -> (i32, i32) {
    %c0_i32 = arith.constant 0 : i32
    %c0_i32_0 = arith.constant 0 : i32
    return %arg0, %c0_i32 : i32, i32
  }
  func.func @transform_1(%arg0: i32) -> (i32, i32) {
    %c0_i32 = arith.constant 0 : i32
    %c0_i32_0 = arith.constant 0 : i32
    %c0_i32_1 = arith.constant 0 : i32
    return %c0_i32, %c0_i32_0 : i32, i32
  }
  func.func @transform_2(%arg0: i32) -> (i32, i32) {
    %c0_i32 = arith.constant 0 : i32
    %c0_i32_0 = arith.constant 0 : i32
    %c0_i32_1 = arith.constant 0 : i32
    return %c0_i32, %c0_i32_0 : i32, i32
  }
  func.func @transform_3(%arg0: i32) -> (i32, i32) {
    %c0_i32 = arith.constant 0 : i32
    %c0_i32_0 = arith.constant 0 : i32
    return %arg0, %c0_i32 : i32, i32
  }
}

</mosaic_0001>

<llo_original>
// kernel: tpu_custom_call.1
$region0: #{tpu_custom_call.1}
  #allocation0 [shape = 'u32[]', space=smem, size = 0x4, offset = 0x4, fixed_abs, tag = 'smem constant byte address 0x4 - core index']
  #allocation1 [shape = 'u32[144,128]{1,0:T(1,128)}', space=vmem, size = 0x12000, scoped, tag = 'internal scratch']
  %s0 = inlined_call_operand.vmem [shape: bf16[64,32], index: 0, kind: input, shape index: {}]
  %s1 = inlined_call_operand.vmem [shape: bf16[32,32], index: 1, kind: input, shape index: {}]
  %s2 = inlined_call_operand.vmem [shape: f32[1,32], index: 2, kind: input, shape index: {}]
  %s3 = inlined_call_operand.vmem [shape: f32[64,32], index: 3, kind: output, shape index: {}]
  %s4 = sld [smem:[#allocation0]]
  $region45: #{tpu_custom_call.1} parent=0
    _
  %s6 = ssub.s32 1, %s4
  %s7 = scalar_select 0, %s6, %s4
  loop: start=0, step=1, limit=4
  $region2: #{tpu_custom_call.1} parent=0 // loop_pre_header
    _
  $region3: #{tpu_custom_call.1} parent=0 // loop_header
    %s9 = sphi 0, %s13
    %p10 = scmp.ge.s32.totalorder %s9, 4
    %s19 = sphi 0, %s21
    %s22 = sphi 0, %s19
    %s23 = sphi 0, %s22
    %s39 = sphi 0, %s23
    %s43 = sphi 0, %s43
    %s45 = sphi 0, %s43
    %s46 = sphi 0, %s45
    %s60 = sphi 0, %s46
    %s64 = sphi 0, %s64
    %s66 = sphi 0, %s64
    %s67 = sphi 0, %s66
    %s81 = sphi 0, %s67
    %s87 = sphi 0, %s89
    %s90 = sphi 0, %s87
    %s91 = sphi 0, %s90
    %s107 = sphi 0, %s91
  $region4: #{tpu_custom_call.1} parent=0 // loop_header_branch
    %12 = sbr.rel (%p10) target = $region8
  $region5: #{tpu_custom_call.1} parent=0 // loop_body
    %s14 = ssub.s32 %s9, 1
    %s15 = ssub.s32 %s9, 2
    %s16 = sadd.s32 %s9, 1
    %s17 = ssub.s32 %s9, %s16
    %p18 = scmp.eq.s32.totalorder %s17, 0
    %s20 = sadd.s32 %s19, 1
    %s21 = scalar_select %p18, %s19, %s20
    %p24 = pneg %p18
    %p25 = scmp.eq.s32.totalorder %s9, 1
    %p26 = por %p24, %p25
    %p27 = scmp.ne.s32.totalorder %s19, %s22
    %p28 = scmp.eq.s32.totalorder %s9, 0
    %p29 = por %p27, %p28
    %p30 = scmp.ne.s32.totalorder %s19, %s22
    %p31 = scmp.eq.s32.totalorder %s14, 1
    %p32 = por %p30, %p31
    %p33 = scmp.ne.s32.totalorder %s22, %s23
    %p34 = scmp.eq.s32.totalorder %s14, 0
    %p35 = por %p33, %p34
    %p36 = scmp.ne.s32.totalorder %s22, %s23
    %p37 = scmp.eq.s32.totalorder %s15, 1
    %p38 = por %p36, %p37
    %p40 = scmp.ne.s32.totalorder %s23, %s39
    %p41 = scmp.eq.s32.totalorder %s15, 0
    %p42 = por %p40, %p41
    %s44 = sadd.s32 %s43, 1
    %p47 = scmp.eq.s32.totalorder %s9, 1
    %p48 = scmp.ne.s32.totalorder %s43, %s45
    %p49 = scmp.eq.s32.totalorder %s9, 0
    %p50 = por %p48, %p49
    %p51 = scmp.ne.s32.totalorder %s43, %s45
    %p52 = scmp.eq.s32.totalorder %s14, 1
    %p53 = por %p51, %p52
    %p54 = scmp.ne.s32.totalorder %s45, %s46
    %p55 = scmp.eq.s32.totalorder %s14, 0
    %p56 = por %p54, %p55
    %p57 = scmp.ne.s32.totalorder %s45, %s46
    %p58 = scmp.eq.s32.totalorder %s15, 1
    %p59 = por %p57, %p58
    %p61 = scmp.ne.s32.totalorder %s46, %s60
    %p62 = scmp.eq.s32.totalorder %s15, 0
    %p63 = por %p61, %p62
    %s65 = sadd.s32 %s64, 1
    %p68 = scmp.eq.s32.totalorder %s9, 1
    %p69 = scmp.ne.s32.totalorder %s64, %s66
    %p70 = scmp.eq.s32.totalorder %s9, 0
    %p71 = por %p69, %p70
    %p72 = scmp.ne.s32.totalorder %s64, %s66
    %p73 = scmp.eq.s32.totalorder %s14, 1
    %p74 = por %p72, %p73
    %p75 = scmp.ne.s32.totalorder %s66, %s67
    %p76 = scmp.eq.s32.totalorder %s14, 0
    %p77 = por %p75, %p76
    %p78 = scmp.ne.s32.totalorder %s66, %s67
    %p79 = scmp.eq.s32.totalorder %s15, 1
    %p80 = por %p78, %p79
    %p82 = scmp.ne.s32.totalorder %s67, %s81
    %p83 = scmp.eq.s32.totalorder %s15, 0
    %p84 = por %p82, %p83
    %s85 = ssub.s32 %s9, %s16
    %p86 = scmp.eq.s32.totalorder %s85, 0
    %s88 = sadd.s32 %s87, 1
    %s89 = scalar_select %p86, %s87, %s88
    %p92 = pneg %p86
    %p93 = scmp.eq.s32.totalorder %s9, 1
    %p94 = por %p92, %p93
    %p95 = scmp.ne.s32.totalorder %s87, %s90
    %p96 = scmp.eq.s32.totalorder %s9, 0
    %p97 = por %p95, %p96
    %p98 = scmp.ne.s32.totalorder %s87, %s90
    %p99 = scmp.eq.s32.totalorder %s14, 1
    %p100 = por %p98, %p99
    %p101 = scmp.ne.s32.totalorder %s90, %s91
    %p102 = scmp.eq.s32.totalorder %s14, 0
    %p103 = por %p101, %p102
    %p104 = scmp.ne.s32.totalorder %s90, %s91
    %p105 = scmp.eq.s32.totalorder %s15, 1
    %p106 = por %p104, %p105
    %p108 = scmp.ne.s32.totalorder %s91, %s107
    %p109 = scmp.eq.s32.totalorder %s15, 0
    %p110 = por %p108, %p109
    %p111 = scmp.le.s32.totalorder 1, %s9
    %p112 = scmp.lt.s32.totalorder %s9, 3
    %p113 = pnand %p111, %p112
    %p114 = pneg %p113
    // Predicated region
    $region9: #{tpu_custom_call.1} parent=5 // pred_check
      _
    $region10: #{tpu_custom_call.1} parent=5 // pred_check_branch
      %116 = sbr.rel (%p113) target = $region12
    $region11: #{tpu_custom_call.1} parent=5 // pred_region
      %s117 = ssub.s32 %s9, 1
      // Predicated region
      $region13: #{tpu_custom_call.1} parent=11 // pred_check
        %p118 = pneg %p56
      $region14: #{tpu_custom_call.1} parent=11 // pred_check_branch
        %120 = sbr.rel (%p118) target = $region16
      $region15: #{tpu_custom_call.1} parent=11 // pred_region
        _
      $region16: #{tpu_custom_call.1} parent=11 // pred_fallthru
        _
      // Predicated region
      $region17: #{tpu_custom_call.1} parent=11 // pred_check
        %p121 = pneg %p77
      $region18: #{tpu_custom_call.1} parent=11 // pred_check_branch
        %123 = sbr.rel (%p121) target = $region20
      $region19: #{tpu_custom_call.1} parent=11 // pred_region
        _
      $region20: #{tpu_custom_call.1} parent=11 // pred_fallthru
        _
    $region12: #{tpu_custom_call.1} parent=5 // pred_fallthru
      _
    %p124 = scmp.lt.s32.totalorder %s9, 2
    // Predicated region
    $region21: #{tpu_custom_call.1} parent=5 // pred_check
      %p125 = pneg %p124
    $region22: #{tpu_custom_call.1} parent=5 // pred_check_branch
      %127 = sbr.rel (%p125) target = $region24
    $region23: #{tpu_custom_call.1} parent=5 // pred_region
      // Predicated region
      $region25: #{tpu_custom_call.1} parent=23 // pred_check
        %p128 = pneg %p29
      $region26: #{tpu_custom_call.1} parent=23 // pred_check_branch
        %130 = sbr.rel (%p128) target = $region28
      $region27: #{tpu_custom_call.1} parent=23 // pred_region
        %s131 = smul.u32 4, %s9
        %p132 = scmp.lt.s32.totalorder %s131, 7
        %s133 = scalar_select %p132, %s131, 7
        %s134 = smul.addr %s133, 4
        %s135 = scalar_lea.vmem %s0, %s134
        %s136 = smul.u32 4, %s9
      $region28: #{tpu_custom_call.1} parent=23 // pred_fallthru
        _
    $region24: #{tpu_custom_call.1} parent=5 // pred_fallthru
      _
    %p137 = scmp.le.s32.totalorder 1, %s9
    %p138 = scmp.lt.s32.totalorder %s9, 3
    %p139 = pnand %p137, %p138
    %p140 = pneg %p139
    // Predicated region
    $region29: #{tpu_custom_call.1} parent=5 // pred_check
      _
    $region30: #{tpu_custom_call.1} parent=5 // pred_check_branch
      %142 = sbr.rel (%p139) target = $region32
    $region31: #{tpu_custom_call.1} parent=5 // pred_region
      %s143 = ssub.s32 %s9, 1
      %s144 = smul.u32 4, %s14
      %p145 = scmp.lt.s32.totalorder %s144, 7
      %s146 = scalar_select %p145, %s144, 7
      %s147 = smul.addr %s146, 4
      %s148 = scalar_lea.vmem %s0, %s147
      %p149 = pneg %p35
      %p150 = pneg %p32
      %p151 = pneg %p56
      %p152 = pneg %p53
      %p153 = pneg %p77
      %p154 = pneg %p74
      %p155 = pneg %p103
      %p156 = pneg %p100
      %s157 = smul.u32 4, %s14
      %p158 = scmp.lt.s32.totalorder %s157, 7
      %s159 = scalar_select %p158, %s157, 7
      %s160 = smul.addr %s159, 8
      %s161 = scalar_lea.vmem %s3, %s160
      %s162 = smul.u32 4, %s14
      %p163 = scmp.lt.s32.totalorder %s162, 7
      %s164 = scalar_select %p163, %s162, 7
      %s165 = smul.addr %s164, 4
      %s166 = scalar_lea.vmem %s0, %s165
      %s167 = smul.u32 4, %s14
      %s168 = smul.u32 4, %s14
      %p169 = scmp.lt.s32.totalorder %s168, 7
      %s170 = scalar_select %p169, %s168, 7
      %s171 = smul.addr %s170, 8
      %s172 = scalar_lea.vmem %s3, %s171
      %s173 = smul.u32 4, %s14
      %v175 = vld [vmem:[%s166] sm:$0xf]
      %v176 = vld [vmem:[%s166 + $0x4] sm:$0xf]
      %v177 = vld [vmem:[%s166 + $0x8] sm:$0xf]
      %v178 = vld [vmem:[%s166 + $0xc] sm:$0xf]
      %v179 = vld [vmem:[%s1] sm:$0xf]
      %v180 = vld [vmem:[%s1 + $0x4] sm:$0xf]
      %v181 = vld [vmem:[%s1 + $0x8] sm:$0xf]
      %v182 = vld [vmem:[%s1 + $0xc] sm:$0xf]
      %v183 = vld [vmem:[%s2] sm:$0x1]
      %v185 = vlaneseq
      %v186 = vshrl.u32 %v185, 7
      %v187 = vsub.s32 0, %v186
      %v188 = vrot.slane %v183, %v187
      %v194 = vunpack.c.l.b16 %v175
      %v195 = vunpack.c.l.b16 %v176
      %v196 = vunpack.c.l.b16 %v177
      %v197 = vunpack.c.l.b16 %v178
      %v198 = vpack.c.b16 %v195, %v194
      %v199 = vpack.c.b16 %v197, %v196
      %v204 = vunpack.c.l.b16 %v179
      %v205 = vunpack.c.l.b16 %v180
      %v206 = vunpack.c.l.b16 %v181
      %v207 = vunpack.c.l.b16 %v182
      %v208 = vpack.c.b16 %v205, %v204
      %v209 = vpack.c.b16 %v207, %v206
      %vm212 = vcmask 261120
      %v214 = vsel %vm212, %v198, 0
      %v217 = vsel %vm212, %v199, 0
      %219 = vmatprep.subr.bf16.mxu0 0
      %220 = vmatpush1.bf16.msra.mxu0 0
      %221 = vmatprep.subr.bf16.mxu0 0
      %222 = vmatpush1.bf16.msra.mxu0 0
      %223 = vmatprep.subr.bf16.mxu0 0
      %224 = vmatpush1.bf16.msra.mxu0 0
      %225 = vmatprep.subr.bf16.mxu0 0
      %226 = vmatpush1.bf16.msra.mxu0 0
      %227 = vmatprep.subr.bf16.mxu0 0
      %228 = vmatpush1.bf16.msra.mxu0 0
      %229 = vmatprep.subr.bf16.mxu0 0
      %230 = vmatpush1.bf16.msra.mxu0 0
      %231 = vmatprep.subr.bf16.mxu0 0
      %232 = vmatpush1.bf16.msra.mxu0 %v209
      %233 = vmatprep.subr.bf16.mxu0 0
      %234 = vmatpush1.bf16.msra.mxu0 %v208
      %235 = vmatprep.subr.bf16.mxu0 0
      %236 = vmatpush2.bf16.msra.mxu0 0
      %237 = vmatprep.subr.bf16.mxu0 0
      %238 = vmatpush2.bf16.msra.mxu0 0
      %239 = vmatprep.subr.bf16.mxu0 0
      %240 = vmatpush2.bf16.msra.mxu0 0
      %241 = vmatprep.subr.bf16.mxu0 0
      %242 = vmatpush2.bf16.msra.mxu0 0
      %243 = vmatprep.subr.bf16.mxu0 0
      %244 = vmatpush2.bf16.msra.mxu0 0
      %245 = vmatprep.subr.bf16.mxu0 0
      %246 = vmatpush2.bf16.msra.mxu0 0
      %247 = vmatprep.subr.bf16.mxu0 0
      %248 = vmatpush2.bf16.msra.mxu0 0
      %249 = vmatprep.subr.bf16.mxu0 0
      %250 = vmatpush2.bf16.msra.mxu0 0
      %251 = vmatprep.mubr.bf16.mxu0 0
      %252 = vmatmul.mubr.bf16.gmra.mxu0 %v214
      %v253 = vpop.f32.mrf.mxu0
      %v254 = vadd.f32 %v188, %v253
      %v255 = vpop.f32.mrf.mxu0
      %v256 = vpop.f32.mrf.mxu0
      %v257 = vadd.f32 %v188, %v256
      %v258 = vpop.f32.mrf.mxu0
      %259 = vmatprep.mubr.bf16.mxu0 0
      %260 = vmatmul.mubr.bf16.gmra.mxu0 %v217
      %v261 = vpop.f32.mrf.mxu0
      %v262 = vadd.f32 %v188, %v261
      %v263 = vpop.f32.mrf.mxu0
      %v264 = vpop.f32.mrf.mxu0
      %v265 = vadd.f32 %v188, %v264
      %v266 = vpop.f32.mrf.mxu0
      %267 = vdwg.mxu0
      %v268 = vtanh.pop %v254
      %v269 = vtanh.pop %v257
      %v270 = vtanh.pop %v262
      %v271 = vtanh.pop %v265
      %272 = vst.msk [vmem:[%s172] sm:$0xff] %vm212, %v268
      %273 = vst.msk [vmem:[%s172 + $0x8] sm:$0xff] %vm212, %v269
      %274 = vst.msk [vmem:[%s172 + $0x10] sm:$0xff] %vm212, %v270
      %275 = vst.msk [vmem:[%s172 + $0x18] sm:$0xff] %vm212, %v271
      %s276 = smul.u32 4, %s14
      %p277 = scmp.lt.s32.totalorder %s276, 7
      %s278 = scalar_select %p277, %s276, 7
      %s279 = smul.addr %s278, 8
      %s280 = scalar_lea.vmem %s3, %s279
      // Predicated region
      $region33: #{tpu_custom_call.1} parent=31 // pred_check
        %p281 = pneg %p100
      $region34: #{tpu_custom_call.1} parent=31 // pred_check_branch
        %283 = sbr.rel (%p281) target = $region36
      $region35: #{tpu_custom_call.1} parent=31 // pred_region
        %s284 = smul.u32 4, %s14
      $region36: #{tpu_custom_call.1} parent=31 // pred_fallthru
        _
    $region32: #{tpu_custom_call.1} parent=5 // pred_fallthru
      _
    %p285 = scmp.le.s32.totalorder 2, %s9
    // Predicated region
    $region37: #{tpu_custom_call.1} parent=5 // pred_check
      %p286 = pneg %p285
    $region38: #{tpu_custom_call.1} parent=5 // pred_check_branch
      %288 = sbr.rel (%p286) target = $region40
    $region39: #{tpu_custom_call.1} parent=5 // pred_region
      %s289 = ssub.s32 %s9, 2
      // Predicated region
      $region41: #{tpu_custom_call.1} parent=39 // pred_check
        %p290 = pneg %p106
      $region42: #{tpu_custom_call.1} parent=39 // pred_check_branch
        %292 = sbr.rel (%p290) target = $region44
      $region43: #{tpu_custom_call.1} parent=39 // pred_region
        %s293 = smul.u32 4, %s15
        %p294 = scmp.lt.s32.totalorder %s293, 7
        %s295 = scalar_select %p294, %s293, 7
        %s296 = smul.addr %s295, 8
        %s297 = scalar_lea.vmem %s3, %s296
      $region44: #{tpu_custom_call.1} parent=39 // pred_fallthru
        _
    $region40: #{tpu_custom_call.1} parent=5 // pred_fallthru
      _
  $region6: #{tpu_custom_call.1} parent=0 // loop_footer
    %s13 = sadd.s32 1, %s9
  $region7: #{tpu_custom_call.1} parent=0 // loop_footer_branch
    %8 = sbr.rel target = $region3
  $region8: #{tpu_custom_call.1} parent=0 // loop_exit
    _

</llo_original>
